<compile_context>
chip_gen: v7x
topology: tpu7x:2x2x1
jax: 0.10.0
libtpu: 0.0.40
codegen_flags: <defaults>
</compile_context>

<pallas_src>
import functools

import jax
import jax.numpy as jnp
import numpy as np
from jax import lax
from jax.experimental import pallas as pl
from jax.experimental.pallas import tpu as pltpu

NUM_NODES = 4
NUM_OPS = 4                                   # [zero, skip, conv3, avgpool3]
NUM_EDGES = NUM_NODES * (NUM_NODES + 1) // 2  # 10


def _edge_index(i, j):
    # Edges are appended in order i=0: j=0; i=1: j=0,1; ... -> e = i*(i+1)/2 + j
    return i * (i + 1) // 2 + j


def cell_kernel(x_ref, w0_ref, w1_ref, w2_ref, w3_ref, nbias_ref,
                proj_w_ref, proj_b_ref, out_ref, nodes_ref, rhs_ref, *,
                seq_len, channels, mxu_dtype):
    """One batch-tile of the Cell forward.

    x_ref      : VMEM [C, L]            L = batch_tile * T, lane-dense
    w{j}_ref   : VMEM [(4-j)*C, 3C]     alpha/skip/pool-folded stacked weights
                                        for all edges consuming states[j]
    nbias_ref  : VMEM [4C, 1]           per-node pre-summed conv bias
    proj_w_ref : VMEM [C, 4C]           1x1 projection weight (flattened)
    proj_b_ref : VMEM [C, 1]            projection bias
    out_ref    : VMEM [C, L]
    nodes_ref  : VMEM scratch [4C, L]   node accumulators (f32)
    rhs_ref    : VMEM scratch [3C, L]   stacked taps for the current state
    """
    C = channels
    L = x_ref.shape[1]
    T = seq_len
    f32 = jnp.float32
    w_refs = (w0_ref, w1_ref, w2_ref, w3_ref)

    # Lane masks: zero the element that wrapped across a length-T segment
    # boundary after a roll (each batch element occupies one T-long segment).
    lane_t = lax.broadcasted_iota(jnp.int32, (1, L), 1) % T
    mask_not_first = lane_t != 0          # valid lanes for the h[t-1] tap
    mask_not_last = lane_t != (T - 1)     # valid lanes for the h[t+1] tap

    def write_taps(h):
        # rhs rows [0:C)   = h[t-1]  (zero at t == 0)
        # rhs rows [C:2C)  = h[t]
        # rhs rows [2C:3C) = h[t+1]  (zero at t == T-1)
        # pltpu.roll requires non-negative shifts: use L-1 (== -1 mod L).
        h_m1 = jnp.where(mask_not_first, pltpu.roll(h, shift=1, axis=1), 0.0)
        h_p1 = jnp.where(mask_not_last, pltpu.roll(h, shift=L - 1, axis=1), 0.0)
        rhs_ref[0 * C:1 * C, :] = h_m1.astype(mxu_dtype)
        rhs_ref[1 * C:2 * C, :] = h.astype(mxu_dtype)
        rhs_ref[2 * C:3 * C, :] = h_p1.astype(mxu_dtype)

    # Node accumulators start from the per-node, alpha-scaled conv bias
    # (pre-summed over incoming edges in the wrapper).
    nodes_ref[...] = jnp.broadcast_to(nbias_ref[...], nodes_ref.shape)

    state = x_ref[...].astype(f32)                    # states[0]
    for j in range(NUM_NODES):
        write_taps(state)
        # One MXU matmul per state: skip, avgpool and the edge alphas are all
        # folded into the stacked weights; K = 3C fills the MXU contraction.
        contrib = jnp.dot(w_refs[j][...], rhs_ref[...],
                          preferred_element_type=f32)
        # Consumers of state j are nodes j..NUM_NODES-1 -> contiguous slab.
        nodes_ref[j * C:, :] = nodes_ref[j * C:, :] + contrib
        if j + 1 < NUM_NODES:
            state = nodes_ref[j * C:(j + 1) * C, :]   # node j == states[j+1]

    # Fused 1x1 projection over the concatenated node states (single matmul).
    out = jnp.dot(proj_w_ref[...], nodes_ref[...].astype(mxu_dtype),
                  preferred_element_type=f32) + proj_b_ref[...]
    out_ref[...] = out.astype(out_ref.dtype)


def _fold_mixed_op_weights(alphas, conv_w, conv_b, *, mxu_dtype):
    """Fold skip / avgpool / edge alphas into per-state stacked conv weights.

    Effective tap weights per edge:
      W_eff[e, k] = a_conv*conv_w[e, k] + (a_pool/3)*I + (k == 1)*a_skip*I
    Effective bias per edge: a_conv*conv_b[e]; 'none' contributes zero.
    """
    E, _, C, _ = conv_w.shape
    eye = jnp.eye(C, dtype=jnp.float32)
    a_skip = alphas[:, 1]
    a_conv = alphas[:, 2]
    a_pool = alphas[:, 3]

    w_eff = (a_conv[:, None, None, None] * conv_w
             + (a_pool / 3.0)[:, None, None, None] * eye[None, None])
    skip_taps = jnp.stack([jnp.zeros_like(eye), eye, jnp.zeros_like(eye)],
                          axis=0)                              # [3, C, C]
    w_eff = w_eff + a_skip[:, None, None, None] * skip_taps[None]
    b_eff = a_conv[:, None] * conv_b                            # [E, C]

    # Per-state stacked weights: state j is consumed by nodes i = j..3.
    w_states = []
    for j in range(NUM_NODES):
        rows = []
        for i in range(j, NUM_NODES):
            e = _edge_index(i, j)
            rows.append(jnp.concatenate(
                [w_eff[e, 0], w_eff[e, 1], w_eff[e, 2]], axis=1))   # [C, 3C]
        w_states.append(jnp.concatenate(rows, axis=0).astype(mxu_dtype))

    # Per-node bias, summed over all incoming edges: [4C, 1].
    node_bias = jnp.concatenate(
        [sum(b_eff[_edge_index(i, j)] for j in range(i + 1))
         for i in range(NUM_NODES)], axis=0)[:, None].astype(jnp.float32)
    return w_states, node_bias


def _choose_batch_tile(B, T, target_lanes=512):
    """Pick bt | B with L = bt*T a multiple of 128 near target_lanes (else full)."""
    divisors = [bt for bt in range(1, B + 1) if B % bt == 0]
    aligned = [bt for bt in divisors if (bt * T) % 128 == 0]
    if not aligned:
        return B                                   # single full block (lane-exact)
    best = min(aligned, key=lambda bt: abs(bt * T - target_lanes))
    # Prefer >= 2 grid steps (shards batch tiles across v7x's two TensorCores)
    # as long as each tile stays lane-dense.
    if best == B:
        smaller = [bt for bt in aligned if bt < B and bt * T >= 256]
        if smaller:
            best = max(smaller)
    return best


def cell_forward(x, alphas, conv_w, conv_b, proj_w, proj_b, *,
                 mxu_dtype=jnp.bfloat16):
    B, C, T = x.shape

    # Fold all alphas / skip / avgpool / biases into pre-stacked weights once,
    # in plain XLA, outside the kernel.
    w_states, node_bias = _fold_mixed_op_weights(alphas, conv_w, conv_b,
                                                 mxu_dtype=mxu_dtype)
    proj_w_flat = proj_w.reshape(C, NUM_NODES * C).astype(mxu_dtype)
    proj_b_col = proj_b[:, None].astype(jnp.float32)

    # Lane-dense activation layout: [C, B*T].
    x_flat = jnp.transpose(x, (1, 0, 2)).reshape(C, B * T)

    bt = _choose_batch_tile(B, T)
    L = bt * T
    grid = (B // bt,)

    # VMEM budget per TensorCore: weights + double-buffered activation blocks +
    # scratch + live temporaries; capped below v7x's 64 MiB physical VMEM.
    mxu_bytes = jnp.dtype(mxu_dtype).itemsize
    wt_bytes = ((10 * C) * (3 * C) + C * NUM_NODES * C) * mxu_bytes \
        + (NUM_NODES * C + C) * 4
    act_bytes = 2 * 2 * C * L * 4                        # x + out, double-buffered
    scratch_bytes = NUM_NODES * C * L * 4 + 3 * C * L * mxu_bytes
    temp_bytes = 8 * C * L * 4                           # taps / contrib / projection
    vmem_limit = int(min(48 * 2**20,
                         max(16 * 2**20,
                             2 * (wt_bytes + act_bytes + scratch_bytes
                                  + temp_bytes))))

    kernel = functools.partial(cell_kernel, seq_len=T, channels=C,
                               mxu_dtype=mxu_dtype)

    grid_spec = pltpu.PrefetchScalarGridSpec(
        num_scalar_prefetch=0,
        grid=grid,
        in_specs=[
            pl.BlockSpec((C, L), lambda g: (0, g)),                    # x
            pl.BlockSpec(w_states[0].shape, lambda g: (0, 0)),         # state-0 W
            pl.BlockSpec(w_states[1].shape, lambda g: (0, 0)),         # state-1 W
            pl.BlockSpec(w_states[2].shape, lambda g: (0, 0)),         # state-2 W
            pl.BlockSpec(w_states[3].shape, lambda g: (0, 0)),         # state-3 W
            pl.BlockSpec((NUM_NODES * C, 1), lambda g: (0, 0)),        # node bias
            pl.BlockSpec((C, NUM_NODES * C), lambda g: (0, 0)),        # proj W
            pl.BlockSpec((C, 1), lambda g: (0, 0)),                    # proj b
        ],
        out_specs=pl.BlockSpec((C, L), lambda g: (0, g)),
        scratch_shapes=[
            pltpu.VMEM((NUM_NODES * C, L), jnp.float32),               # node slab
            pltpu.VMEM((3 * C, L), mxu_dtype),                         # taps RHS
        ],
    )

    out_flat = pl.pallas_call(
        kernel,
        out_shape=jax.ShapeDtypeStruct((C, B * T), jnp.float32),
        grid_spec=grid_spec,
        compiler_params=pltpu.CompilerParams(
            dimension_semantics=("parallel",),
            vmem_limit_bytes=vmem_limit),
    )(x_flat, *w_states, node_bias, proj_w_flat, proj_b_col)

    return out_flat.reshape(C, B, T).transpose(1, 0, 2)


def cell_reference(x, alphas, conv_w, conv_b, proj_w, proj_b):
    """Pure-JAX reference mirroring the PyTorch semantics."""
    B, C, T = x.shape

    def conv3(h, e):
        hp = jnp.pad(h, ((0, 0), (0, 0), (1, 1)))
        out = jnp.zeros((B, C, T), jnp.float32)
        for k in range(3):
            out = out + jnp.einsum('oc,bct->bot', conv_w[e, k], hp[:, :, k:k + T])
        return out + conv_b[e][None, :, None]

    def avg3(h):
        hp = jnp.pad(h, ((0, 0), (0, 0), (1, 1)))
        return (hp[:, :, 0:T] + hp[:, :, 1:T + 1] + hp[:, :, 2:T + 2]) / 3.0

    def mixed(h, e):
        return alphas[e, 1] * h + alphas[e, 2] * conv3(h, e) + alphas[e, 3] * avg3(h)

    states = [x]
    offset = 0
    for i in range(NUM_NODES):
        node = sum(mixed(states[j], offset + j) for j in range(i + 1))
        states.append(node)
        offset += i + 1

    out = sum(jnp.einsum('oc,bct->bot', proj_w[:, n, :], states[n + 1])
              for n in range(NUM_NODES))
    return out + proj_b[None, :, None]


if __name__ == "__main__":
    B, C, T = 2, 4, 16

    key = jax.random.PRNGKey(0)
    kx, ka, kw, kb, kp, kpb = jax.random.split(key, 6)

    x = jax.random.normal(kx, (B, C, T), dtype=jnp.float32)
    # Architecture weights (one softmax-normalized vector per edge).
    alphas = jax.nn.softmax(
        jax.random.normal(ka, (NUM_EDGES, NUM_OPS), dtype=jnp.float32), axis=-1)
    # Per-edge Conv1d(C, C, 3) parameters, stored as [edge, tap, out_c, in_c].
    conv_w = 0.3 * jax.random.normal(kw, (NUM_EDGES, 3, C, C), dtype=jnp.float32)
    conv_b = 0.1 * jax.random.normal(kb, (NUM_EDGES, C), dtype=jnp.float32)
    # Projection Conv1d(C*NUM_NODES, C, 1): weight [C, NUM_NODES, C], bias [C].
    proj_w = 0.3 * jax.random.normal(kp, (C, NUM_NODES, C), dtype=jnp.float32)
    proj_b = 0.1 * jax.random.normal(kpb, (C,), dtype=jnp.float32)

    ref = cell_reference(x, alphas, conv_w, conv_b, proj_w, proj_b)

    # Tight numerical check with f32 MXU operands.
    out_f32 = jax.block_until_ready(
        cell_forward(x, alphas, conv_w, conv_b, proj_w, proj_b,
                     mxu_dtype=jnp.float32))
    np.testing.assert_allclose(np.asarray(out_f32), np.asarray(ref),
                               rtol=1e-4, atol=1e-4)

    # Default perf config (bf16 MXU operands, f32 accumulation), loose tolerance.
    out = jax.block_until_ready(
        cell_forward(x, alphas, conv_w, conv_b, proj_w, proj_b))
    np.testing.assert_allclose(np.asarray(out), np.asarray(ref),
                               rtol=1e-1, atol=1e-1)

    assert out.shape == (B, C, T)
    print("KERNEL_OK")
</pallas_src>

<mosaic_0001>
module attributes {stable_mosaic.version = 11 : i64} {
  func.func @cell_kernel(%arg0: i32, %arg1: memref<4x32xf32, #tpu.memory_space<vmem>>, %arg2: memref<16x12xf32, #tpu.memory_space<vmem>>, %arg3: memref<12x12xf32, #tpu.memory_space<vmem>>, %arg4: memref<8x12xf32, #tpu.memory_space<vmem>>, %arg5: memref<4x12xf32, #tpu.memory_space<vmem>>, %arg6: memref<16x1xf32, #tpu.memory_space<vmem>>, %arg7: memref<4x16xf32, #tpu.memory_space<vmem>>, %arg8: memref<4x1xf32, #tpu.memory_space<vmem>>, %arg9: memref<4x32xf32, #tpu.memory_space<vmem>>, %arg10: memref<16x32xf32, #tpu.memory_space<vmem>>, %arg11: memref<12x32xf32, #tpu.memory_space<vmem>>) attributes {dimension_semantics = [#tpu.dimension_semantics<parallel>], iteration_bounds = array<i64: 1>, scalar_prefetch = 0 : i64, scratch_operands = 2 : i64, tpu.core_type = #tpu.core_type<tc>, window_params = [{transform_indices = @transform_0, window_bounds = array<i64: 4, 32>}, {pipeline_mode = #tpu.pipeline_mode<synchronous>, transform_indices = @transform_1, window_bounds = array<i64: 16, 12>}, {pipeline_mode = #tpu.pipeline_mode<synchronous>, transform_indices = @transform_2, window_bounds = array<i64: 12, 12>}, {pipeline_mode = #tpu.pipeline_mode<synchronous>, transform_indices = @transform_3, window_bounds = array<i64: 8, 12>}, {pipeline_mode = #tpu.pipeline_mode<synchronous>, transform_indices = @transform_4, window_bounds = array<i64: 4, 12>}, {pipeline_mode = #tpu.pipeline_mode<synchronous>, transform_indices = @transform_5, window_bounds = array<i64: 16, 1>}, {pipeline_mode = #tpu.pipeline_mode<synchronous>, transform_indices = @transform_6, window_bounds = array<i64: 4, 16>}, {pipeline_mode = #tpu.pipeline_mode<synchronous>, transform_indices = @transform_7, window_bounds = array<i64: 4, 1>}, {transform_indices = @transform_8, window_bounds = array<i64: 4, 32>}]} {
    %0 = tpu.iota {dimensions = array<i32: 1>} : vector<1x32xi32>
    %c16_i32 = arith.constant 16 : i32
    %c0_i32 = arith.constant 0 : i32
    %1 = arith.cmpi eq, %c16_i32, %c0_i32 : i32
    %c1_i32 = arith.constant 1 : i32
    %2 = arith.select %1, %c1_i32, %c16_i32 : i32
    %3 = vector.broadcast %2 : i32 to vector<1x32xi32>
    %4 = arith.remsi %0, %3 : vector<1x32xi32>
    %c0_i32_0 = arith.constant 0 : i32
    %5 = vector.broadcast %c0_i32_0 : i32 to vector<1x32xi32>
    %6 = arith.cmpi ne, %4, %5 : vector<1x32xi32>
    %c0_i32_1 = arith.constant 0 : i32
    %7 = vector.broadcast %c0_i32_1 : i32 to vector<1x32xi32>
    %8 = arith.cmpi slt, %4, %7 : vector<1x32xi32>
    %c0_i32_2 = arith.constant 0 : i32
    %9 = arith.cmpi slt, %2, %c0_i32_2 : i32
    %10 = vector.broadcast %9 : i1 to vector<1x32xi1>
    %11 = vector.broadcast %10 : vector<1x32xi1> to vector<1x32xi1>
    %12 = arith.xori %8, %11 : vector<1x32xi1>
    %13 = arith.andi %12, %6 : vector<1x32xi1>
    %14 = vector.broadcast %2 : i32 to vector<1x32xi32>
    %15 = arith.addi %4, %14 : vector<1x32xi32>
    %16 = arith.select %13, %15, %4 : vector<1x32xi1>, vector<1x32xi32>
    %c0_i32_3 = arith.constant 0 : i32
    %17 = vector.broadcast %c0_i32_3 : i32 to vector<1x32xi32>
    %18 = arith.cmpi ne, %16, %17 : vector<1x32xi32>
    %c15_i32 = arith.constant 15 : i32
    %19 = vector.broadcast %c15_i32 : i32 to vector<1x32xi32>
    %20 = arith.cmpi ne, %16, %19 : vector<1x32xi32>
    %c0 = arith.constant 0 : index
    %c0_4 = arith.constant 0 : index
    %21 = vector.load %arg6[%c0, %c0_4] : memref<16x1xf32, #tpu.memory_space<vmem>>, vector<16x1xf32>
    %22 = vector.shape_cast %21 : vector<16x1xf32> to vector<16x1xf32>
    %23 = vector.broadcast %22 : vector<16x1xf32> to vector<16x32xf32>
    %c0_5 = arith.constant 0 : index
    %c0_6 = arith.constant 0 : index
    %24 = vector.load %arg10[%c0_5, %c0_6] : memref<16x32xf32, #tpu.memory_space<vmem>>, vector<16x32xf32>
    tpu.vector_store %arg10[%c0_5, %c0_6], %23 {strides = array<i32>} : memref<16x32xf32, #tpu.memory_space<vmem>>, vector<16x32xf32>,
    %c0_7 = arith.constant 0 : index
    %c0_8 = arith.constant 0 : index
    %25 = vector.load %arg1[%c0_7, %c0_8] : memref<4x32xf32, #tpu.memory_space<vmem>>, vector<4x32xf32>
    %c1_i32_9 = arith.constant 1 : i32
    %26 = tpu.dynamic_rotate %25 by %c1_i32_9 dim 1 : vector<4x32xf32>, i32 -> vector<4x32xf32>
    %cst = arith.constant 0.000000e+00 : f32
    %27 = vector.shape_cast %18 : vector<1x32xi1> to vector<1x32xi1>
    %28 = vector.broadcast %27 : vector<1x32xi1> to vector<4x32xi1>
    %29 = vector.broadcast %cst : f32 to vector<4x32xf32>
    %30 = arith.select %28, %26, %29 : vector<4x32xi1>, vector<4x32xf32>
    %c31_i32 = arith.constant 31 : i32
    %31 = tpu.dynamic_rotate %25 by %c31_i32 dim 1 : vector<4x32xf32>, i32 -> vector<4x32xf32>
    %cst_10 = arith.constant 0.000000e+00 : f32
    %32 = vector.shape_cast %20 : vector<1x32xi1> to vector<1x32xi1>
    %33 = vector.broadcast %32 : vector<1x32xi1> to vector<4x32xi1>
    %34 = vector.broadcast %cst_10 : f32 to vector<4x32xf32>
    %35 = arith.select %33, %31, %34 : vector<4x32xi1>, vector<4x32xf32>
    %c0_11 = arith.constant 0 : index
    %c0_12 = arith.constant 0 : index
    %36 = vector.load %arg11[%c0_11, %c0_12] : memref<12x32xf32, #tpu.memory_space<vmem>>, vector<4x32xf32>
    tpu.vector_store %arg11[%c0_11, %c0_12], %30 {strides = array<i32>} : memref<12x32xf32, #tpu.memory_space<vmem>>, vector<4x32xf32>,
    %c4 = arith.constant 4 : index
    %c0_13 = arith.constant 0 : index
    %37 = vector.load %arg11[%c4, %c0_13] : memref<12x32xf32, #tpu.memory_space<vmem>>, vector<4x32xf32>
    tpu.vector_store %arg11[%c4, %c0_13], %25 {strides = array<i32>} : memref<12x32xf32, #tpu.memory_space<vmem>>, vector<4x32xf32>,
    %c8 = arith.constant 8 : index
    %c0_14 = arith.constant 0 : index
    %38 = vector.load %arg11[%c8, %c0_14] : memref<12x32xf32, #tpu.memory_space<vmem>>, vector<4x32xf32>
    tpu.vector_store %arg11[%c8, %c0_14], %35 {strides = array<i32>} : memref<12x32xf32, #tpu.memory_space<vmem>>, vector<4x32xf32>,
    %c0_15 = arith.constant 0 : index
    %c0_16 = arith.constant 0 : index
    %39 = vector.load %arg2[%c0_15, %c0_16] : memref<16x12xf32, #tpu.memory_space<vmem>>, vector<16x12xf32>
    %c0_17 = arith.constant 0 : index
    %c0_18 = arith.constant 0 : index
    %40 = vector.load %arg11[%c0_17, %c0_18] : memref<12x32xf32, #tpu.memory_space<vmem>>, vector<12x32xf32>
    %cst_19 = arith.constant dense<0.000000e+00> : vector<16x32xf32>
    %41 = tpu.matmul %39, %40, %cst_19 {dimension_numbers = #tpu.dot_dimension_numbers<[1], [0], [0], [1], [0, 0, 1, 1], [], []>} : vector<16x12xf32>, vector<12x32xf32>, vector<16x32xf32> -> vector<16x32xf32>
    %c0_20 = arith.constant 0 : index
    %c0_21 = arith.constant 0 : index
    %42 = vector.load %arg10[%c0_20, %c0_21] : memref<16x32xf32, #tpu.memory_space<vmem>>, vector<16x32xf32>
    %43 = arith.addf %42, %41 : vector<16x32xf32>
    %c0_22 = arith.constant 0 : index
    %c0_23 = arith.constant 0 : index
    %44 = vector.load %arg10[%c0_22, %c0_23] : memref<16x32xf32, #tpu.memory_space<vmem>>, vector<16x32xf32>
    tpu.vector_store %arg10[%c0_22, %c0_23], %43 {strides = array<i32>} : memref<16x32xf32, #tpu.memory_space<vmem>>, vector<16x32xf32>,
    %c0_24 = arith.constant 0 : index
    %c0_25 = arith.constant 0 : index
    %45 = vector.load %arg10[%c0_24, %c0_25] : memref<16x32xf32, #tpu.memory_space<vmem>>, vector<4x32xf32>
    %c1_i32_26 = arith.constant 1 : i32
    %46 = tpu.dynamic_rotate %45 by %c1_i32_26 dim 1 : vector<4x32xf32>, i32 -> vector<4x32xf32>
    %cst_27 = arith.constant 0.000000e+00 : f32
    %47 = vector.shape_cast %18 : vector<1x32xi1> to vector<1x32xi1>
    %48 = vector.broadcast %47 : vector<1x32xi1> to vector<4x32xi1>
    %49 = vector.broadcast %cst_27 : f32 to vector<4x32xf32>
    %50 = arith.select %48, %46, %49 : vector<4x32xi1>, vector<4x32xf32>
    %c31_i32_28 = arith.constant 31 : i32
    %51 = tpu.dynamic_rotate %45 by %c31_i32_28 dim 1 : vector<4x32xf32>, i32 -> vector<4x32xf32>
    %cst_29 = arith.constant 0.000000e+00 : f32
    %52 = vector.shape_cast %20 : vector<1x32xi1> to vector<1x32xi1>
    %53 = vector.broadcast %52 : vector<1x32xi1> to vector<4x32xi1>
    %54 = vector.broadcast %cst_29 : f32 to vector<4x32xf32>
    %55 = arith.select %53, %51, %54 : vector<4x32xi1>, vector<4x32xf32>
    %c0_30 = arith.constant 0 : index
    %c0_31 = arith.constant 0 : index
    %56 = vector.load %arg11[%c0_30, %c0_31] : memref<12x32xf32, #tpu.memory_space<vmem>>, vector<4x32xf32>
    tpu.vector_store %arg11[%c0_30, %c0_31], %50 {strides = array<i32>} : memref<12x32xf32, #tpu.memory_space<vmem>>, vector<4x32xf32>,
    %c4_32 = arith.constant 4 : index
    %c0_33 = arith.constant 0 : index
    %57 = vector.load %arg11[%c4_32, %c0_33] : memref<12x32xf32, #tpu.memory_space<vmem>>, vector<4x32xf32>
    tpu.vector_store %arg11[%c4_32, %c0_33], %45 {strides = array<i32>} : memref<12x32xf32, #tpu.memory_space<vmem>>, vector<4x32xf32>,
    %c8_34 = arith.constant 8 : index
    %c0_35 = arith.constant 0 : index
    %58 = vector.load %arg11[%c8_34, %c0_35] : memref<12x32xf32, #tpu.memory_space<vmem>>, vector<4x32xf32>
    tpu.vector_store %arg11[%c8_34, %c0_35], %55 {strides = array<i32>} : memref<12x32xf32, #tpu.memory_space<vmem>>, vector<4x32xf32>,
    %c0_36 = arith.constant 0 : index
    %c0_37 = arith.constant 0 : index
    %59 = vector.load %arg3[%c0_36, %c0_37] : memref<12x12xf32, #tpu.memory_space<vmem>>, vector<12x12xf32>
    %c0_38 = arith.constant 0 : index
    %c0_39 = arith.constant 0 : index
    %60 = vector.load %arg11[%c0_38, %c0_39] : memref<12x32xf32, #tpu.memory_space<vmem>>, vector<12x32xf32>
    %cst_40 = arith.constant dense<0.000000e+00> : vector<12x32xf32>
    %61 = tpu.matmul %59, %60, %cst_40 {dimension_numbers = #tpu.dot_dimension_numbers<[1], [0], [0], [1], [0, 0, 1, 1], [], []>} : vector<12x12xf32>, vector<12x32xf32>, vector<12x32xf32> -> vector<12x32xf32>
    %c4_41 = arith.constant 4 : index
    %c0_42 = arith.constant 0 : index
    %62 = vector.load %arg10[%c4_41, %c0_42] : memref<16x32xf32, #tpu.memory_space<vmem>>, vector<12x32xf32>
    %63 = arith.addf %62, %61 : vector<12x32xf32>
    %c4_43 = arith.constant 4 : index
    %c0_44 = arith.constant 0 : index
    %64 = vector.load %arg10[%c4_43, %c0_44] : memref<16x32xf32, #tpu.memory_space<vmem>>, vector<12x32xf32>
    tpu.vector_store %arg10[%c4_43, %c0_44], %63 {strides = array<i32>} : memref<16x32xf32, #tpu.memory_space<vmem>>, vector<12x32xf32>,
    %c4_45 = arith.constant 4 : index
    %c0_46 = arith.constant 0 : index
    %65 = vector.load %arg10[%c4_45, %c0_46] : memref<16x32xf32, #tpu.memory_space<vmem>>, vector<4x32xf32>
    %c1_i32_47 = arith.constant 1 : i32
    %66 = tpu.dynamic_rotate %65 by %c1_i32_47 dim 1 : vector<4x32xf32>, i32 -> vector<4x32xf32>
    %cst_48 = arith.constant 0.000000e+00 : f32
    %67 = vector.shape_cast %18 : vector<1x32xi1> to vector<1x32xi1>
    %68 = vector.broadcast %67 : vector<1x32xi1> to vector<4x32xi1>
    %69 = vector.broadcast %cst_48 : f32 to vector<4x32xf32>
    %70 = arith.select %68, %66, %69 : vector<4x32xi1>, vector<4x32xf32>
    %c31_i32_49 = arith.constant 31 : i32
    %71 = tpu.dynamic_rotate %65 by %c31_i32_49 dim 1 : vector<4x32xf32>, i32 -> vector<4x32xf32>
    %cst_50 = arith.constant 0.000000e+00 : f32
    %72 = vector.shape_cast %20 : vector<1x32xi1> to vector<1x32xi1>
    %73 = vector.broadcast %72 : vector<1x32xi1> to vector<4x32xi1>
    %74 = vector.broadcast %cst_50 : f32 to vector<4x32xf32>
    %75 = arith.select %73, %71, %74 : vector<4x32xi1>, vector<4x32xf32>
    %c0_51 = arith.constant 0 : index
    %c0_52 = arith.constant 0 : index
    %76 = vector.load %arg11[%c0_51, %c0_52] : memref<12x32xf32, #tpu.memory_space<vmem>>, vector<4x32xf32>
    tpu.vector_store %arg11[%c0_51, %c0_52], %70 {strides = array<i32>} : memref<12x32xf32, #tpu.memory_space<vmem>>, vector<4x32xf32>,
    %c4_53 = arith.constant 4 : index
    %c0_54 = arith.constant 0 : index
    %77 = vector.load %arg11[%c4_53, %c0_54] : memref<12x32xf32, #tpu.memory_space<vmem>>, vector<4x32xf32>
    tpu.vector_store %arg11[%c4_53, %c0_54], %65 {strides = array<i32>} : memref<12x32xf32, #tpu.memory_space<vmem>>, vector<4x32xf32>,
    %c8_55 = arith.constant 8 : index
    %c0_56 = arith.constant 0 : index
    %78 = vector.load %arg11[%c8_55, %c0_56] : memref<12x32xf32, #tpu.memory_space<vmem>>, vector<4x32xf32>
    tpu.vector_store %arg11[%c8_55, %c0_56], %75 {strides = array<i32>} : memref<12x32xf32, #tpu.memory_space<vmem>>, vector<4x32xf32>,
    %c0_57 = arith.constant 0 : index
    %c0_58 = arith.constant 0 : index
    %79 = vector.load %arg4[%c0_57, %c0_58] : memref<8x12xf32, #tpu.memory_space<vmem>>, vector<8x12xf32>
    %c0_59 = arith.constant 0 : index
    %c0_60 = arith.constant 0 : index
    %80 = vector.load %arg11[%c0_59, %c0_60] : memref<12x32xf32, #tpu.memory_space<vmem>>, vector<12x32xf32>
    %cst_61 = arith.constant dense<0.000000e+00> : vector<8x32xf32>
    %81 = tpu.matmul %79, %80, %cst_61 {dimension_numbers = #tpu.dot_dimension_numbers<[1], [0], [0], [1], [0, 0, 1, 1], [], []>} : vector<8x12xf32>, vector<12x32xf32>, vector<8x32xf32> -> vector<8x32xf32>
    %c8_62 = arith.constant 8 : index
    %c0_63 = arith.constant 0 : index
    %82 = vector.load %arg10[%c8_62, %c0_63] : memref<16x32xf32, #tpu.memory_space<vmem>>, vector<8x32xf32>
    %83 = arith.addf %82, %81 : vector<8x32xf32>
    %c8_64 = arith.constant 8 : index
    %c0_65 = arith.constant 0 : index
    %84 = vector.load %arg10[%c8_64, %c0_65] : memref<16x32xf32, #tpu.memory_space<vmem>>, vector<8x32xf32>
    tpu.vector_store %arg10[%c8_64, %c0_65], %83 {strides = array<i32>} : memref<16x32xf32, #tpu.memory_space<vmem>>, vector<8x32xf32>,
    %c8_66 = arith.constant 8 : index
    %c0_67 = arith.constant 0 : index
    %85 = vector.load %arg10[%c8_66, %c0_67] : memref<16x32xf32, #tpu.memory_space<vmem>>, vector<4x32xf32>
    %c1_i32_68 = arith.constant 1 : i32
    %86 = tpu.dynamic_rotate %85 by %c1_i32_68 dim 1 : vector<4x32xf32>, i32 -> vector<4x32xf32>
    %cst_69 = arith.constant 0.000000e+00 : f32
    %87 = vector.shape_cast %18 : vector<1x32xi1> to vector<1x32xi1>
    %88 = vector.broadcast %87 : vector<1x32xi1> to vector<4x32xi1>
    %89 = vector.broadcast %cst_69 : f32 to vector<4x32xf32>
    %90 = arith.select %88, %86, %89 : vector<4x32xi1>, vector<4x32xf32>
    %c31_i32_70 = arith.constant 31 : i32
    %91 = tpu.dynamic_rotate %85 by %c31_i32_70 dim 1 : vector<4x32xf32>, i32 -> vector<4x32xf32>
    %cst_71 = arith.constant 0.000000e+00 : f32
    %92 = vector.shape_cast %20 : vector<1x32xi1> to vector<1x32xi1>
    %93 = vector.broadcast %92 : vector<1x32xi1> to vector<4x32xi1>
    %94 = vector.broadcast %cst_71 : f32 to vector<4x32xf32>
    %95 = arith.select %93, %91, %94 : vector<4x32xi1>, vector<4x32xf32>
    %c0_72 = arith.constant 0 : index
    %c0_73 = arith.constant 0 : index
    %96 = vector.load %arg11[%c0_72, %c0_73] : memref<12x32xf32, #tpu.memory_space<vmem>>, vector<4x32xf32>
    tpu.vector_store %arg11[%c0_72, %c0_73], %90 {strides = array<i32>} : memref<12x32xf32, #tpu.memory_space<vmem>>, vector<4x32xf32>,
    %c4_74 = arith.constant 4 : index
    %c0_75 = arith.constant 0 : index
    %97 = vector.load %arg11[%c4_74, %c0_75] : memref<12x32xf32, #tpu.memory_space<vmem>>, vector<4x32xf32>
    tpu.vector_store %arg11[%c4_74, %c0_75], %85 {strides = array<i32>} : memref<12x32xf32, #tpu.memory_space<vmem>>, vector<4x32xf32>,
    %c8_76 = arith.constant 8 : index
    %c0_77 = arith.constant 0 : index
    %98 = vector.load %arg11[%c8_76, %c0_77] : memref<12x32xf32, #tpu.memory_space<vmem>>, vector<4x32xf32>
    tpu.vector_store %arg11[%c8_76, %c0_77], %95 {strides = array<i32>} : memref<12x32xf32, #tpu.memory_space<vmem>>, vector<4x32xf32>,
    %c0_78 = arith.constant 0 : index
    %c0_79 = arith.constant 0 : index
    %99 = vector.load %arg5[%c0_78, %c0_79] : memref<4x12xf32, #tpu.memory_space<vmem>>, vector<4x12xf32>
    %c0_80 = arith.constant 0 : index
    %c0_81 = arith.constant 0 : index
    %100 = vector.load %arg11[%c0_80, %c0_81] : memref<12x32xf32, #tpu.memory_space<vmem>>, vector<12x32xf32>
    %cst_82 = arith.constant dense<0.000000e+00> : vector<4x32xf32>
    %101 = tpu.matmul %99, %100, %cst_82 {dimension_numbers = #tpu.dot_dimension_numbers<[1], [0], [0], [1], [0, 0, 1, 1], [], []>} : vector<4x12xf32>, vector<12x32xf32>, vector<4x32xf32> -> vector<4x32xf32>
    %c12 = arith.constant 12 : index
    %c0_83 = arith.constant 0 : index
    %102 = vector.load %arg10[%c12, %c0_83] : memref<16x32xf32, #tpu.memory_space<vmem>>, vector<4x32xf32>
    %103 = arith.addf %102, %101 : vector<4x32xf32>
    %c12_84 = arith.constant 12 : index
    %c0_85 = arith.constant 0 : index
    %104 = vector.load %arg10[%c12_84, %c0_85] : memref<16x32xf32, #tpu.memory_space<vmem>>, vector<4x32xf32>
    tpu.vector_store %arg10[%c12_84, %c0_85], %103 {strides = array<i32>} : memref<16x32xf32, #tpu.memory_space<vmem>>, vector<4x32xf32>,
    %c0_86 = arith.constant 0 : index
    %c0_87 = arith.constant 0 : index
    %105 = vector.load %arg7[%c0_86, %c0_87] : memref<4x16xf32, #tpu.memory_space<vmem>>, vector<4x16xf32>
    %c0_88 = arith.constant 0 : index
    %c0_89 = arith.constant 0 : index
    %106 = vector.load %arg10[%c0_88, %c0_89] : memref<16x32xf32, #tpu.memory_space<vmem>>, vector<16x32xf32>
    %cst_90 = arith.constant dense<0.000000e+00> : vector<4x32xf32>
    %107 = tpu.matmul %105, %106, %cst_90 {dimension_numbers = #tpu.dot_dimension_numbers<[1], [0], [0], [1], [0, 0, 1, 1], [], []>} : vector<4x16xf32>, vector<16x32xf32>, vector<4x32xf32> -> vector<4x32xf32>
    %c0_91 = arith.constant 0 : index
    %c0_92 = arith.constant 0 : index
    %108 = vector.load %arg8[%c0_91, %c0_92] : memref<4x1xf32, #tpu.memory_space<vmem>>, vector<4x1xf32>
    %109 = vector.broadcast %108 : vector<4x1xf32> to vector<4x32xf32>
    %110 = arith.addf %107, %109 : vector<4x32xf32>
    %c0_93 = arith.constant 0 : index
    %c0_94 = arith.constant 0 : index
    %111 = vector.load %arg9[%c0_93, %c0_94] : memref<4x32xf32, #tpu.memory_space<vmem>>, vector<4x32xf32>
    tpu.vector_store %arg9[%c0_93, %c0_94], %110 {strides = array<i32>} : memref<4x32xf32, #tpu.memory_space<vmem>>, vector<4x32xf32>,
    return
  }
  func.func @transform_0(%arg0: i32) -> (i32, i32) {
    %c0_i32 = arith.constant 0 : i32
    %c0_i32_0 = arith.constant 0 : i32
    return %c0_i32, %arg0 : i32, i32
  }
  func.func @transform_1(%arg0: i32) -> (i32, i32) {
    %c0_i32 = arith.constant 0 : i32
    %c0_i32_0 = arith.constant 0 : i32
    %c0_i32_1 = arith.constant 0 : i32
    return %c0_i32, %c0_i32_0 : i32, i32
  }
  func.func @transform_2(%arg0: i32) -> (i32, i32) {
    %c0_i32 = arith.constant 0 : i32
    %c0_i32_0 = arith.constant 0 : i32
    %c0_i32_1 = arith.constant 0 : i32
    return %c0_i32, %c0_i32_0 : i32, i32
  }
  func.func @transform_3(%arg0: i32) -> (i32, i32) {
    %c0_i32 = arith.constant 0 : i32
    %c0_i32_0 = arith.constant 0 : i32
    %c0_i32_1 = arith.constant 0 : i32
    return %c0_i32, %c0_i32_0 : i32, i32
  }
  func.func @transform_4(%arg0: i32) -> (i32, i32) {
    %c0_i32 = arith.constant 0 : i32
    %c0_i32_0 = arith.constant 0 : i32
    %c0_i32_1 = arith.constant 0 : i32
    return %c0_i32, %c0_i32_0 : i32, i32
  }
  func.func @transform_5(%arg0: i32) -> (i32, i32) {
    %c0_i32 = arith.constant 0 : i32
    %c0_i32_0 = arith.constant 0 : i32
    %c0_i32_1 = arith.constant 0 : i32
    return %c0_i32, %c0_i32_0 : i32, i32
  }
  func.func @transform_6(%arg0: i32) -> (i32, i32) {
    %c0_i32 = arith.constant 0 : i32
    %c0_i32_0 = arith.constant 0 : i32
    %c0_i32_1 = arith.constant 0 : i32
    return %c0_i32, %c0_i32_0 : i32, i32
  }
  func.func @transform_7(%arg0: i32) -> (i32, i32) {
    %c0_i32 = arith.constant 0 : i32
    %c0_i32_0 = arith.constant 0 : i32
    %c0_i32_1 = arith.constant 0 : i32
    return %c0_i32, %c0_i32_0 : i32, i32
  }
  func.func @transform_8(%arg0: i32) -> (i32, i32) {
    %c0_i32 = arith.constant 0 : i32
    %c0_i32_0 = arith.constant 0 : i32
    return %c0_i32, %arg0 : i32, i32
  }
}

</mosaic_0001>

<llo_original>
// kernel: tpu_custom_call.1
$region0: #{tpu_custom_call.1}
  #allocation0 [shape = 'u32[]', space=smem, size = 0x4, offset = 0x4, fixed_abs, tag = 'smem constant byte address 0x4 - core index']
  #allocation1 [shape = 'u32[144,128]{1,0:T(1,128)}', space=vmem, size = 0x12000, scoped, tag = 'internal scratch']
  #allocation2 [shape = 'f32[16,32]{1,0:T(8,128)}', space=vmem, size = 0x2000, scoped, tag = 'scratch operand']
  #allocation3 [shape = 'f32[12,32]{1,0:T(8,128)}', space=vmem, size = 0x2000, scoped, tag = 'scratch operand']
  %s0 = inlined_call_operand.hbm [shape: f32[4,32], index: 0, kind: input, shape index: {}]
  %s1 = inlined_call_operand.vmem [shape: f32[16,12], index: 1, kind: input, shape index: {}]
  %s2 = inlined_call_operand.hbm [shape: f32[12,12], index: 2, kind: input, shape index: {}]
  %s3 = inlined_call_operand.vmem [shape: f32[8,12], index: 3, kind: input, shape index: {}]
  %s4 = inlined_call_operand.vmem [shape: f32[4,12], index: 4, kind: input, shape index: {}]
  %s5 = inlined_call_operand.vmem [shape: f32[16,1], index: 5, kind: input, shape index: {}]
  %s6 = inlined_call_operand.vmem [shape: f32[4,16], index: 6, kind: input, shape index: {}]
  %s7 = inlined_call_operand.vmem [shape: f32[4,1], index: 7, kind: input, shape index: {}]
  %s8 = inlined_call_operand.hbm [shape: f32[4,32], index: 8, kind: output, shape index: {}]
  %s9 = sld [smem:[#allocation0]]
  $region50: #{tpu_custom_call.1} parent=0
    _
  %s11 = ssub.s32 1, %s9
  %s12 = scalar_select 0, %s11, %s9
  $region1: #{tpu_custom_call.1} parent=0
    #allocation4 [shape = 'u8[2048]{0}', space=vmem, size = 0x800, scoped, tag = 'input window, operand 0, single buffered']
    #allocation5 [shape = 's32[1]{0}', space=sflag, size = 0x4, scoped, tag = 'scoped memory for tpu_custom_call.1']
    #allocation6 [shape = 's32[1]{0}', space=sflag, size = 0x4, scoped, tag = 'scoped memory for tpu_custom_call.1']
    #allocation7 [shape = 'u8[8192]{0}', space=vmem, size = 0x2000, scoped, tag = 'input window, operand 2, single buffered']
    #allocation8 [shape = 's32[1]{0}', space=sflag, size = 0x4, scoped, tag = 'scoped memory for tpu_custom_call.1']
    #allocation9 [shape = 'u8[2048]{0}', space=vmem, size = 0x800, scoped, tag = 'output window, operand 0, single buffered']
    %13 = vsyncpa [#allocation5], 0
    %14 = vsyncpa [#allocation8], 0
    %15 = vsyncpa [#allocation6], 0
    // Predicated region
    $region2: #{tpu_custom_call.1} parent=1 // pred_check
      _
    $region3: #{tpu_custom_call.1} parent=1 // pred_check_branch
      %17 = sbr.rel (0) target = $region5
    $region4: #{tpu_custom_call.1} parent=1 // pred_region
      %s19 = ssub.s32 64, 64
      %20 = vsyncadd [#allocation5], %s19
      %s22 = sshll.u32 [#allocation4], 4
      %s23 = int_to_ptr.vmem [resolvable:$true] %s22
      %25 = dma.hbm_to_vmem [thread:$0]  %s0, 64, %s23, [#allocation5]
    $region5: #{tpu_custom_call.1} parent=1 // pred_fallthru
      _
    // Predicated region
    $region6: #{tpu_custom_call.1} parent=1 // pred_check
      _
    $region7: #{tpu_custom_call.1} parent=1 // pred_check_branch
      %27 = sbr.rel (0) target = $region9
    $region8: #{tpu_custom_call.1} parent=1 // pred_region
      _
    $region9: #{tpu_custom_call.1} parent=1 // pred_fallthru
      _
    // Predicated region
    $region10: #{tpu_custom_call.1} parent=1 // pred_check
      _
    $region11: #{tpu_custom_call.1} parent=1 // pred_check_branch
      %29 = sbr.rel (0) target = $region13
    $region12: #{tpu_custom_call.1} parent=1 // pred_region
      %s31 = ssub.s32 256, 256
      %32 = vsyncadd [#allocation8], %s31
      %s33 = sshll.u32 [#allocation7], 4
      %s34 = int_to_ptr.vmem [resolvable:$true] %s33
      %39 = dma.hbm_to_vmem [thread:$0]  %s2, 256, %s34, [#allocation8], 128, 128, 8
    $region13: #{tpu_custom_call.1} parent=1 // pred_fallthru
      _
    // Predicated region
    $region14: #{tpu_custom_call.1} parent=1 // pred_check
      _
    $region15: #{tpu_custom_call.1} parent=1 // pred_check_branch
      %41 = sbr.rel (0) target = $region17
    $region16: #{tpu_custom_call.1} parent=1 // pred_region
      _
    $region17: #{tpu_custom_call.1} parent=1 // pred_fallthru
      _
    // Predicated region
    $region18: #{tpu_custom_call.1} parent=1 // pred_check
      _
    $region19: #{tpu_custom_call.1} parent=1 // pred_check_branch
      %43 = sbr.rel (0) target = $region21
    $region20: #{tpu_custom_call.1} parent=1 // pred_region
      _
    $region21: #{tpu_custom_call.1} parent=1 // pred_fallthru
      _
    // Predicated region
    $region22: #{tpu_custom_call.1} parent=1 // pred_check
      _
    $region23: #{tpu_custom_call.1} parent=1 // pred_check_branch
      %45 = sbr.rel (0) target = $region25
    $region24: #{tpu_custom_call.1} parent=1 // pred_region
      _
    $region25: #{tpu_custom_call.1} parent=1 // pred_fallthru
      _
    // Predicated region
    $region26: #{tpu_custom_call.1} parent=1 // pred_check
      _
    $region27: #{tpu_custom_call.1} parent=1 // pred_check_branch
      %47 = sbr.rel (0) target = $region29
    $region28: #{tpu_custom_call.1} parent=1 // pred_region
      _
    $region29: #{tpu_custom_call.1} parent=1 // pred_fallthru
      _
    // Predicated region
    $region30: #{tpu_custom_call.1} parent=1 // pred_check
      _
    $region31: #{tpu_custom_call.1} parent=1 // pred_check_branch
      %49 = sbr.rel (0) target = $region33
    $region32: #{tpu_custom_call.1} parent=1 // pred_region
      _
    $region33: #{tpu_custom_call.1} parent=1 // pred_fallthru
      _
    // Predicated region
    $region34: #{tpu_custom_call.1} parent=1 // pred_check
      _
    $region35: #{tpu_custom_call.1} parent=1 // pred_check_branch
      %51 = sbr.rel (0) target = $region37
    $region36: #{tpu_custom_call.1} parent=1 // pred_region
      %52 = dma.done [#allocation5], 64
    $region37: #{tpu_custom_call.1} parent=1 // pred_fallthru
      _
    // Predicated region
    $region38: #{tpu_custom_call.1} parent=1 // pred_check
      _
    $region39: #{tpu_custom_call.1} parent=1 // pred_check_branch
      %54 = sbr.rel (0) target = $region41
    $region40: #{tpu_custom_call.1} parent=1 // pred_region
      %55 = dma.done [#allocation8], 256
    $region41: #{tpu_custom_call.1} parent=1 // pred_fallthru
      _
    %v56 = vlaneseq
    %v57 = vand.u32 %v56, 127
    %vm58 = vcmp.lt.s32.totalorder %v57, 0
    %v59 = vsub.s32 0, %v57
    %v60 = vsel %vm58, %v59, %v57
    %v61 = vshrl.u32 %v60, 4
    %v62 = vand.u32 %v60, 15
    %v63 = vsub.s32 0, %v62
    %v64 = vsel %vm58, %v63, %v62
    %vm65 = vcmp.ne.s32.totalorder %v64, 0
    %vm66 = vcmp.lt.s32.totalorder %v64, 0
    %vm67 = vmand %vm66, %vm65
    %v68 = vadd.s32 %v64, 16
    %v69 = vsel %vm67, %v68, %v64
    %vm70 = vcmp.ne.s32.totalorder %v69, 0
    %vm71 = vcmp.ne.s32.totalorder %v69, 15
    %v72 = vld [vmem:[%s5] sm:$0xff]
    %v73 = vld [vmem:[%s5 + $0x8] sm:$0xff]
    %75 = vset.pattern.permute.xlu0 0
    %76 = vperm.xlu0 %75, %v72
    %v77 = vpop.permute.xlu0 %76
    %80 = vset.pattern.permute.xlu0 0
    %81 = vperm.xlu0 %80, %v73
    %v82 = vpop.permute.xlu0 %81
    %vm84 = vcmask 261120
    %85 = vst.msk [vmem:[#allocation2] sm:$0xff] %vm84, %v77
    %86 = vst.msk [vmem:[#allocation2 + $0x8] sm:$0xff] %vm84, %v82
    %v87 = vld [vmem:[#allocation4] sm:$0xf]
    %vm88 = vcmask 1047808
    %89 = vrot.lane.b32.xlu0 %v87, 32
    %v90 = vpop.permute.xlu0 %89
    %v91 = vsel %vm88, %v90, %v87
    %92 = vrot.lane.b32.xlu0 %v91, 32
    %v93 = vpop.permute.xlu0 %92
    %v94 = vsel %vm88, %v93, %v87
    %v95 = vsel %vm70, 1, 0
    %vm96 = vcmp.eq.s32.totalorder %v95, 1
    %98 = vrot.lane.b32.xlu0 %v94, 97
    %v99 = vpop.permute.xlu0 %98
    %v101 = vsel %vm96, %v99, 0.0
    %v102 = vsel %vm71, 1, 0
    %vm103 = vcmp.eq.s32.totalorder %v102, 1
    %104 = vrot.lane.b32.xlu0 %v94, 127
    %v105 = vpop.permute.xlu0 %104
    %v107 = vsel %vm103, %v105, 0.0
    %vm108 = vcmask 257024
    %109 = vst.msk [vmem:[#allocation3] sm:$0xf] %vm108, %v101
    %110 = vst.msk [vmem:[#allocation3 + $0x4] sm:$0xf] %vm108, %v87
    %111 = vst.msk [vmem:[#allocation3 + $0x8] sm:$0xf] %vm108, %v107
    %v112 = vld [vmem:[%s1] sm:$0xff]
    %v113 = vld [vmem:[%s1 + $0x8] sm:$0xff]
    %v114 = vld [vmem:[#allocation3] sm:$0xff]
    %v115 = vld [vmem:[#allocation3 + $0x8] sm:$0xf]
    %vm116 = vcmask 97280
    %v118 = vsel %vm116, %v112, 0
    %v121 = vsel %vm116, %v113, 0
    %vm123 = vcmask 1043456
    %v125 = vsel %vm123, %v115, 0
    %127 = vmatprep.subr.mxu0 0.0
    %128 = vmatpush1.msra.mxu0 %v114
    %129 = vmatprep.subr.mxu0 0.0
    %130 = vmatpush1.msra.mxu0 %v125
    %131 = vmatprep.subr.mxu0 0.0
    %132 = vmatpush1.msra.mxu0 0.0
    %133 = vmatprep.subr.mxu0 0.0
    %134 = vmatpush1.msra.mxu0 0.0
    %135 = vmatprep.subr.mxu0 0.0
    %136 = vmatpush1.msra.mxu0 0.0
    %137 = vmatprep.subr.mxu0 0.0
    %138 = vmatpush1.msra.mxu0 0.0
    %139 = vmatprep.subr.mxu0 0.0
    %140 = vmatpush1.msra.mxu0 0.0
    %141 = vmatprep.subr.mxu0 0.0
    %142 = vmatpush1.msra.mxu0 0.0
    %143 = vmatprep.subr.mxu0 0.0
    %144 = vmatpush1.msra.mxu0 0.0
    %145 = vmatprep.subr.mxu0 0.0
    %146 = vmatpush1.msra.mxu0 0.0
    %147 = vmatprep.subr.mxu0 0.0
    %148 = vmatpush1.msra.mxu0 0.0
    %149 = vmatprep.subr.mxu0 0.0
    %150 = vmatpush1.msra.mxu0 0.0
    %151 = vmatprep.subr.mxu0 0.0
    %152 = vmatpush1.msra.mxu0 0.0
    %153 = vmatprep.subr.mxu0 0.0
    %154 = vmatpush1.msra.mxu0 0.0
    %155 = vmatprep.subr.mxu0 0.0
    %156 = vmatpush1.msra.mxu0 0.0
    %157 = vmatprep.subr.mxu0 0.0
    %158 = vmatpush1.msra.mxu0 0.0
    %159 = vmatprep.subr.mxu0 0.0
    %160 = vmatpush1.msra.mxu0 0.0
    %161 = vmatprep.subr.mxu0 0.0
    %162 = vmatpush1.msra.mxu0 0.0
    %163 = vmatprep.subr.mxu0 0.0
    %164 = vmatpush1.msra.mxu0 0.0
    %165 = vmatprep.subr.mxu0 0.0
    %166 = vmatpush1.msra.mxu0 0.0
    %167 = vmatprep.subr.mxu0 0.0
    %168 = vmatpush1.msra.mxu0 0.0
    %169 = vmatprep.subr.mxu0 0.0
    %170 = vmatpush1.msra.mxu0 0.0
    %171 = vmatprep.subr.mxu0 0.0
    %172 = vmatpush1.msra.mxu0 0.0
    %173 = vmatprep.subr.mxu0 0.0
    %174 = vmatpush1.msra.mxu0 0.0
    %175 = vmatprep.subr.mxu0 0.0
    %176 = vmatpush1.msra.mxu0 0.0
    %177 = vmatprep.subr.mxu0 0.0
    %178 = vmatpush1.msra.mxu0 0.0
    %179 = vmatprep.subr.mxu0 0.0
    %180 = vmatpush1.msra.mxu0 0.0
    %181 = vmatprep.subr.mxu0 0.0
    %182 = vmatpush1.msra.mxu0 0.0
    %183 = vmatprep.subr.mxu0 0.0
    %184 = vmatpush1.msra.mxu0 0.0
    %185 = vmatprep.subr.mxu0 0.0
    %186 = vmatpush1.msra.mxu0 0.0
    %187 = vmatprep.subr.mxu0 0.0
    %188 = vmatpush1.msra.mxu0 0.0
    %189 = vmatprep.subr.mxu0 0.0
    %190 = vmatpush1.msra.mxu0 0.0
    %191 = vmatprep.mubr.f32.mxu0 0.0
    %192 = vmatmul.mubr.f32.gmra.mrb[0].mxu0 %v118
    %v193 = vpop.f32.mrb[0].mxu0
    %v194 = vadd.f32 0.0, %v193
    %v195 = vpop.f32.mrb[0].mxu0
    %196 = vmatprep.mubr.f32.mxu0 0.0
    %197 = vmatmul.mubr.f32.gmra.mrb[0].mxu0 %v121
    %v198 = vpop.f32.mrb[0].mxu0
    %v199 = vadd.f32 0.0, %v198
    %v200 = vpop.f32.mrb[0].mxu0
    %201 = vdwg.mxu0
    %v202 = vld [vmem:[#allocation2] sm:$0xff]
    %v203 = vld [vmem:[#allocation2 + $0x8] sm:$0xff]
    %v204 = vadd.f32 %v202, %v194
    %v205 = vadd.f32 %v203, %v199
    %206 = vst.msk [vmem:[#allocation2] sm:$0xff] %vm84, %v204
    %207 = vst.msk [vmem:[#allocation2 + $0x8] sm:$0xff] %vm84, %v205
    %v208 = vld [vmem:[#allocation2] sm:$0xf]
    %209 = vrot.lane.b32.xlu0 %v208, 32
    %v210 = vpop.permute.xlu0 %209
    %v211 = vsel %vm88, %v210, %v208
    %212 = vrot.lane.b32.xlu0 %v211, 32
    %v213 = vpop.permute.xlu0 %212
    %v214 = vsel %vm88, %v213, %v208
    %216 = vrot.lane.b32.xlu0 %v214, 97
    %v217 = vpop.permute.xlu0 %216
    %v219 = vsel %vm96, %v217, 0.0
    %220 = vrot.lane.b32.xlu0 %v214, 127
    %v221 = vpop.permute.xlu0 %220
    %v223 = vsel %vm103, %v221, 0.0
    %224 = vst.msk [vmem:[#allocation3] sm:$0xf] %vm108, %v219
    %225 = vst.msk [vmem:[#allocation3 + $0x4] sm:$0xf] %vm108, %v208
    %226 = vst.msk [vmem:[#allocation3 + $0x8] sm:$0xf] %vm108, %v223
    %v227 = vld [vmem:[#allocation7] sm:$0xff]
    %v228 = vld [vmem:[#allocation7 + $0x8] sm:$0xf]
    %v229 = vld [vmem:[#allocation3] sm:$0xff]
    %v230 = vld [vmem:[#allocation3 + $0x8] sm:$0xf]
    %v232 = vsel %vm116, %v227, 0
    %v235 = vsel %vm116, %v228, 0
    %v238 = vsel %vm123, %v230, 0
    %240 = vmatprep.subr.mxu0 0.0
    %241 = vmatpush1.msra.mxu0 %v229
    %242 = vmatprep.subr.mxu0 0.0
    %243 = vmatpush1.msra.mxu0 %v238
    %244 = vmatprep.subr.mxu0 0.0
    %245 = vmatpush1.msra.mxu0 0.0
    %246 = vmatprep.subr.mxu0 0.0
    %247 = vmatpush1.msra.mxu0 0.0
    %248 = vmatprep.subr.mxu0 0.0
    %249 = vmatpush1.msra.mxu0 0.0
    %250 = vmatprep.subr.mxu0 0.0
    %251 = vmatpush1.msra.mxu0 0.0
    %252 = vmatprep.subr.mxu0 0.0
    %253 = vmatpush1.msra.mxu0 0.0
    %254 = vmatprep.subr.mxu0 0.0
    %255 = vmatpush1.msra.mxu0 0.0
    %256 = vmatprep.subr.mxu0 0.0
    %257 = vmatpush1.msra.mxu0 0.0
    %258 = vmatprep.subr.mxu0 0.0
    %259 = vmatpush1.msra.mxu0 0.0
    %260 = vmatprep.subr.mxu0 0.0
    %261 = vmatpush1.msra.mxu0 0.0
    %262 = vmatprep.subr.mxu0 0.0
    %263 = vmatpush1.msra.mxu0 0.0
    %264 = vmatprep.subr.mxu0 0.0
    %265 = vmatpush1.msra.mxu0 0.0
    %266 = vmatprep.subr.mxu0 0.0
    %267 = vmatpush1.msra.mxu0 0.0
    %268 = vmatprep.subr.mxu0 0.0
    %269 = vmatpush1.msra.mxu0 0.0
    %270 = vmatprep.subr.mxu0 0.0
    %271 = vmatpush1.msra.mxu0 0.0
    %272 = vmatprep.subr.mxu0 0.0
    %273 = vmatpush1.msra.mxu0 0.0
    %274 = vmatprep.subr.mxu0 0.0
    %275 = vmatpush1.msra.mxu0 0.0
    %276 = vmatprep.subr.mxu0 0.0
    %277 = vmatpush1.msra.mxu0 0.0
    %278 = vmatprep.subr.mxu0 0.0
    %279 = vmatpush1.msra.mxu0 0.0
    %280 = vmatprep.subr.mxu0 0.0
    %281 = vmatpush1.msra.mxu0 0.0
    %282 = vmatprep.subr.mxu0 0.0
    %283 = vmatpush1.msra.mxu0 0.0
    %284 = vmatprep.subr.mxu0 0.0
    %285 = vmatpush1.msra.mxu0 0.0
    %286 = vmatprep.subr.mxu0 0.0
    %287 = vmatpush1.msra.mxu0 0.0
    %288 = vmatprep.subr.mxu0 0.0
    %289 = vmatpush1.msra.mxu0 0.0
    %290 = vmatprep.subr.mxu0 0.0
    %291 = vmatpush1.msra.mxu0 0.0
    %292 = vmatprep.subr.mxu0 0.0
    %293 = vmatpush1.msra.mxu0 0.0
    %294 = vmatprep.subr.mxu0 0.0
    %295 = vmatpush1.msra.mxu0 0.0
    %296 = vmatprep.subr.mxu0 0.0
    %297 = vmatpush1.msra.mxu0 0.0
    %298 = vmatprep.subr.mxu0 0.0
    %299 = vmatpush1.msra.mxu0 0.0
    %300 = vmatprep.subr.mxu0 0.0
    %301 = vmatpush1.msra.mxu0 0.0
    %302 = vmatprep.subr.mxu0 0.0
    %303 = vmatpush1.msra.mxu0 0.0
    %304 = vmatprep.mubr.f32.mxu0 0.0
    %305 = vmatmul.mubr.f32.gmra.mrb[0].mxu0 %v232
    %v306 = vpop.f32.mrb[0].mxu0
    %v307 = vadd.f32 0.0, %v306
    %v308 = vpop.f32.mrb[0].mxu0
    %309 = vmatprep.mubr.f32.mxu0 0.0
    %310 = vmatmul.mubr.f32.gmra.mrb[0].mxu0 %v235
    %v311 = vpop.f32.mrb[0].mxu0
    %v312 = vadd.f32 0.0, %v311
    %v313 = vpop.f32.mrb[0].mxu0
    %314 = vdwg.mxu0
    %v315 = vld [vmem:[#allocation2 + $0x4] sm:$0xff]
    %v316 = vld [vmem:[#allocation2 + $0xc] sm:$0xf]
    %v317 = vadd.f32 %v315, %v307
    %v318 = vadd.f32 %v316, %v312
    %319 = vst.msk [vmem:[#allocation2 + $0x4] sm:$0xff] %vm84, %v317
    %320 = vst.msk [vmem:[#allocation2 + $0xc] sm:$0xf] %vm108, %v318
    %v321 = vld [vmem:[#allocation2 + $0x4] sm:$0xf]
    %322 = vrot.lane.b32.xlu0 %v321, 32
    %v323 = vpop.permute.xlu0 %322
    %v324 = vsel %vm88, %v323, %v321
    %325 = vrot.lane.b32.xlu0 %v324, 32
    %v326 = vpop.permute.xlu0 %325
    %v327 = vsel %vm88, %v326, %v321
    %329 = vrot.lane.b32.xlu0 %v327, 97
    %v330 = vpop.permute.xlu0 %329
    %v332 = vsel %vm96, %v330, 0.0
    %333 = vrot.lane.b32.xlu0 %v327, 127
    %v334 = vpop.permute.xlu0 %333
    %v336 = vsel %vm103, %v334, 0.0
    %337 = vst.msk [vmem:[#allocation3] sm:$0xf] %vm108, %v332
    %338 = vst.msk [vmem:[#allocation3 + $0x4] sm:$0xf] %vm108, %v321
    %339 = vst.msk [vmem:[#allocation3 + $0x8] sm:$0xf] %vm108, %v336
    %v340 = vld [vmem:[%s3] sm:$0xff]
    %v341 = vld [vmem:[#allocation3] sm:$0xff]
    %v342 = vld [vmem:[#allocation3 + $0x8] sm:$0xf]
    %v344 = vsel %vm116, %v340, 0
    %v347 = vsel %vm123, %v342, 0
    %349 = vmatprep.subr.mxu0 0.0
    %350 = vmatpush1.msra.mxu0 %v341
    %351 = vmatprep.subr.mxu0 0.0
    %352 = vmatpush1.msra.mxu0 %v347
    %353 = vmatprep.subr.mxu0 0.0
    %354 = vmatpush1.msra.mxu0 0.0
    %355 = vmatprep.subr.mxu0 0.0
    %356 = vmatpush1.msra.mxu0 0.0
    %357 = vmatprep.subr.mxu0 0.0
    %358 = vmatpush1.msra.mxu0 0.0
    %359 = vmatprep.subr.mxu0 0.0
    %360 = vmatpush1.msra.mxu0 0.0
    %361 = vmatprep.subr.mxu0 0.0
    %362 = vmatpush1.msra.mxu0 0.0
    %363 = vmatprep.subr.mxu0 0.0
    %364 = vmatpush1.msra.mxu0 0.0
    %365 = vmatprep.subr.mxu0 0.0
    %366 = vmatpush1.msra.mxu0 0.0
    %367 = vmatprep.subr.mxu0 0.0
    %368 = vmatpush1.msra.mxu0 0.0
    %369 = vmatprep.subr.mxu0 0.0
    %370 = vmatpush1.msra.mxu0 0.0
    %371 = vmatprep.subr.mxu0 0.0
    %372 = vmatpush1.msra.mxu0 0.0
    %373 = vmatprep.subr.mxu0 0.0
    %374 = vmatpush1.msra.mxu0 0.0
    %375 = vmatprep.subr.mxu0 0.0
    %376 = vmatpush1.msra.mxu0 0.0
    %377 = vmatprep.subr.mxu0 0.0
    %378 = vmatpush1.msra.mxu0 0.0
    %379 = vmatprep.subr.mxu0 0.0
    %380 = vmatpush1.msra.mxu0 0.0
    %381 = vmatprep.subr.mxu0 0.0
    %382 = vmatpush1.msra.mxu0 0.0
    %383 = vmatprep.subr.mxu0 0.0
    %384 = vmatpush1.msra.mxu0 0.0
    %385 = vmatprep.subr.mxu0 0.0
    %386 = vmatpush1.msra.mxu0 0.0
    %387 = vmatprep.subr.mxu0 0.0
    %388 = vmatpush1.msra.mxu0 0.0
    %389 = vmatprep.subr.mxu0 0.0
    %390 = vmatpush1.msra.mxu0 0.0
    %391 = vmatprep.subr.mxu0 0.0
    %392 = vmatpush1.msra.mxu0 0.0
    %393 = vmatprep.subr.mxu0 0.0
    %394 = vmatpush1.msra.mxu0 0.0
    %395 = vmatprep.subr.mxu0 0.0
    %396 = vmatpush1.msra.mxu0 0.0
    %397 = vmatprep.subr.mxu0 0.0
    %398 = vmatpush1.msra.mxu0 0.0
    %399 = vmatprep.subr.mxu0 0.0
    %400 = vmatpush1.msra.mxu0 0.0
    %401 = vmatprep.subr.mxu0 0.0
    %402 = vmatpush1.msra.mxu0 0.0
    %403 = vmatprep.subr.mxu0 0.0
    %404 = vmatpush1.msra.mxu0 0.0
    %405 = vmatprep.subr.mxu0 0.0
    %406 = vmatpush1.msra.mxu0 0.0
    %407 = vmatprep.subr.mxu0 0.0
    %408 = vmatpush1.msra.mxu0 0.0
    %409 = vmatprep.subr.mxu0 0.0
    %410 = vmatpush1.msra.mxu0 0.0
    %411 = vmatprep.subr.mxu0 0.0
    %412 = vmatpush1.msra.mxu0 0.0
    %413 = vmatprep.mubr.f32.mxu0 0.0
    %414 = vmatmul.mubr.f32.gmra.mrb[0].mxu0 %v344
    %v415 = vpop.f32.mrb[0].mxu0
    %v416 = vadd.f32 0.0, %v415
    %v417 = vpop.f32.mrb[0].mxu0
    %418 = vdwg.mxu0
    %v419 = vld [vmem:[#allocation2 + $0x8] sm:$0xff]
    %v420 = vadd.f32 %v419, %v416
    %421 = vst.msk [vmem:[#allocation2 + $0x8] sm:$0xff] %vm84, %v420
    %v422 = vld [vmem:[#allocation2 + $0x8] sm:$0xf]
    %423 = vrot.lane.b32.xlu0 %v422, 32
    %v424 = vpop.permute.xlu0 %423
    %v425 = vsel %vm88, %v424, %v422
    %426 = vrot.lane.b32.xlu0 %v425, 32
    %v427 = vpop.permute.xlu0 %426
    %v428 = vsel %vm88, %v427, %v422
    %430 = vrot.lane.b32.xlu0 %v428, 97
    %v431 = vpop.permute.xlu0 %430
    %v433 = vsel %vm96, %v431, 0.0
    %434 = vrot.lane.b32.xlu0 %v428, 127
    %v435 = vpop.permute.xlu0 %434
    %v437 = vsel %vm103, %v435, 0.0
    %438 = vst.msk [vmem:[#allocation3] sm:$0xf] %vm108, %v433
    %439 = vst.msk [vmem:[#allocation3 + $0x4] sm:$0xf] %vm108, %v422
    %440 = vst.msk [vmem:[#allocation3 + $0x8] sm:$0xf] %vm108, %v437
    %v441 = vld [vmem:[%s4] sm:$0xf]
    %v442 = vld [vmem:[#allocation3] sm:$0xff]
    %v443 = vld [vmem:[#allocation3 + $0x8] sm:$0xf]
    %v445 = vsel %vm116, %v441, 0
    %v448 = vsel %vm123, %v443, 0
    %450 = vmatprep.subr.mxu0 0.0
    %451 = vmatpush1.msra.mxu0 %v442
    %452 = vmatprep.subr.mxu0 0.0
    %453 = vmatpush1.msra.mxu0 %v448
    %454 = vmatprep.subr.mxu0 0.0
    %455 = vmatpush1.msra.mxu0 0.0
    %456 = vmatprep.subr.mxu0 0.0
    %457 = vmatpush1.msra.mxu0 0.0
    %458 = vmatprep.subr.mxu0 0.0
    %459 = vmatpush1.msra.mxu0 0.0
    %460 = vmatprep.subr.mxu0 0.0
    %461 = vmatpush1.msra.mxu0 0.0
    %462 = vmatprep.subr.mxu0 0.0
    %463 = vmatpush1.msra.mxu0 0.0
    %464 = vmatprep.subr.mxu0 0.0
    %465 = vmatpush1.msra.mxu0 0.0
    %466 = vmatprep.subr.mxu0 0.0
    %467 = vmatpush1.msra.mxu0 0.0
    %468 = vmatprep.subr.mxu0 0.0
    %469 = vmatpush1.msra.mxu0 0.0
    %470 = vmatprep.subr.mxu0 0.0
    %471 = vmatpush1.msra.mxu0 0.0
    %472 = vmatprep.subr.mxu0 0.0
    %473 = vmatpush1.msra.mxu0 0.0
    %474 = vmatprep.subr.mxu0 0.0
    %475 = vmatpush1.msra.mxu0 0.0
    %476 = vmatprep.subr.mxu0 0.0
    %477 = vmatpush1.msra.mxu0 0.0
    %478 = vmatprep.subr.mxu0 0.0
    %479 = vmatpush1.msra.mxu0 0.0
    %480 = vmatprep.subr.mxu0 0.0
    %481 = vmatpush1.msra.mxu0 0.0
    %482 = vmatprep.subr.mxu0 0.0
    %483 = vmatpush1.msra.mxu0 0.0
    %484 = vmatprep.subr.mxu0 0.0
    %485 = vmatpush1.msra.mxu0 0.0
    %486 = vmatprep.subr.mxu0 0.0
    %487 = vmatpush1.msra.mxu0 0.0
    %488 = vmatprep.subr.mxu0 0.0
    %489 = vmatpush1.msra.mxu0 0.0
    %490 = vmatprep.subr.mxu0 0.0
    %491 = vmatpush1.msra.mxu0 0.0
    %492 = vmatprep.subr.mxu0 0.0
    %493 = vmatpush1.msra.mxu0 0.0
    %494 = vmatprep.subr.mxu0 0.0
    %495 = vmatpush1.msra.mxu0 0.0
    %496 = vmatprep.subr.mxu0 0.0
    %497 = vmatpush1.msra.mxu0 0.0
    %498 = vmatprep.subr.mxu0 0.0
    %499 = vmatpush1.msra.mxu0 0.0
    %500 = vmatprep.subr.mxu0 0.0
    %501 = vmatpush1.msra.mxu0 0.0
    %502 = vmatprep.subr.mxu0 0.0
    %503 = vmatpush1.msra.mxu0 0.0
    %504 = vmatprep.subr.mxu0 0.0
    %505 = vmatpush1.msra.mxu0 0.0
    %506 = vmatprep.subr.mxu0 0.0
    %507 = vmatpush1.msra.mxu0 0.0
    %508 = vmatprep.subr.mxu0 0.0
    %509 = vmatpush1.msra.mxu0 0.0
    %510 = vmatprep.subr.mxu0 0.0
    %511 = vmatpush1.msra.mxu0 0.0
    %512 = vmatprep.subr.mxu0 0.0
    %513 = vmatpush1.msra.mxu0 0.0
    %514 = vmatprep.mubr.f32.mxu0 0.0
    %515 = vmatmul.mubr.f32.gmra.mrb[0].mxu0 %v445
    %v516 = vpop.f32.mrb[0].mxu0
    %v517 = vadd.f32 0.0, %v516
    %v518 = vpop.f32.mrb[0].mxu0
    %519 = vdwg.mxu0
    %v520 = vld [vmem:[#allocation2 + $0xc] sm:$0xf]
    %v521 = vadd.f32 %v520, %v517
    %522 = vst.msk [vmem:[#allocation2 + $0xc] sm:$0xf] %vm108, %v521
    %v523 = vld [vmem:[%s6] sm:$0xf]
    %v524 = vld [vmem:[#allocation2] sm:$0xff]
    %v525 = vld [vmem:[#allocation2 + $0x8] sm:$0xff]
    %v526 = vld [vmem:[%s7] sm:$0xf]
    %528 = vset.pattern.permute.xlu0 0
    %529 = vperm.xlu0 %528, %v526
    %v530 = vpop.permute.xlu0 %529
    %vm532 = vcmask 130048
    %v534 = vsel %vm532, %v523, 0
    %536 = vmatprep.subr.mxu0 0.0
    %537 = vmatpush1.msra.mxu0 %v524
    %538 = vmatprep.subr.mxu0 0.0
    %539 = vmatpush1.msra.mxu0 %v525
    %540 = vmatprep.subr.mxu0 0.0
    %541 = vmatpush1.msra.mxu0 0.0
    %542 = vmatprep.subr.mxu0 0.0
    %543 = vmatpush1.msra.mxu0 0.0
    %544 = vmatprep.subr.mxu0 0.0
    %545 = vmatpush1.msra.mxu0 0.0
    %546 = vmatprep.subr.mxu0 0.0
    %547 = vmatpush1.msra.mxu0 0.0
    %548 = vmatprep.subr.mxu0 0.0
    %549 = vmatpush1.msra.mxu0 0.0
    %550 = vmatprep.subr.mxu0 0.0
    %551 = vmatpush1.msra.mxu0 0.0
    %552 = vmatprep.subr.mxu0 0.0
    %553 = vmatpush1.msra.mxu0 0.0
    %554 = vmatprep.subr.mxu0 0.0
    %555 = vmatpush1.msra.mxu0 0.0
    %556 = vmatprep.subr.mxu0 0.0
    %557 = vmatpush1.msra.mxu0 0.0
    %558 = vmatprep.subr.mxu0 0.0
    %559 = vmatpush1.msra.mxu0 0.0
    %560 = vmatprep.subr.mxu0 0.0
    %561 = vmatpush1.msra.mxu0 0.0
    %562 = vmatprep.subr.mxu0 0.0
    %563 = vmatpush1.msra.mxu0 0.0
    %564 = vmatprep.subr.mxu0 0.0
    %565 = vmatpush1.msra.mxu0 0.0
    %566 = vmatprep.subr.mxu0 0.0
    %567 = vmatpush1.msra.mxu0 0.0
    %568 = vmatprep.subr.mxu0 0.0
    %569 = vmatpush1.msra.mxu0 0.0
    %570 = vmatprep.subr.mxu0 0.0
    %571 = vmatpush1.msra.mxu0 0.0
    %572 = vmatprep.subr.mxu0 0.0
    %573 = vmatpush1.msra.mxu0 0.0
    %574 = vmatprep.subr.mxu0 0.0
    %575 = vmatpush1.msra.mxu0 0.0
    %576 = vmatprep.subr.mxu0 0.0
    %577 = vmatpush1.msra.mxu0 0.0
    %578 = vmatprep.subr.mxu0 0.0
    %579 = vmatpush1.msra.mxu0 0.0
    %580 = vmatprep.subr.mxu0 0.0
    %581 = vmatpush1.msra.mxu0 0.0
    %582 = vmatprep.subr.mxu0 0.0
    %583 = vmatpush1.msra.mxu0 0.0
    %584 = vmatprep.subr.mxu0 0.0
    %585 = vmatpush1.msra.mxu0 0.0
    %586 = vmatprep.subr.mxu0 0.0
    %587 = vmatpush1.msra.mxu0 0.0
    %588 = vmatprep.subr.mxu0 0.0
    %589 = vmatpush1.msra.mxu0 0.0
    %590 = vmatprep.subr.mxu0 0.0
    %591 = vmatpush1.msra.mxu0 0.0
    %592 = vmatprep.subr.mxu0 0.0
    %593 = vmatpush1.msra.mxu0 0.0
    %594 = vmatprep.subr.mxu0 0.0
    %595 = vmatpush1.msra.mxu0 0.0
    %596 = vmatprep.subr.mxu0 0.0
    %597 = vmatpush1.msra.mxu0 0.0
    %598 = vmatprep.subr.mxu0 0.0
    %599 = vmatpush1.msra.mxu0 0.0
    %600 = vmatprep.mubr.f32.mxu0 0.0
    %601 = vmatmul.mubr.f32.gmra.mrb[0].mxu0 %v534
    %v602 = vpop.f32.mrb[0].mxu0
    %v603 = vadd.f32 %v530, %v602
    %v604 = vpop.f32.mrb[0].mxu0
    %605 = vdwg.mxu0
    %606 = vst.msk [vmem:[#allocation9] sm:$0xf] %vm108, %v603
    // Predicated region
    $region42: #{tpu_custom_call.1} parent=1 // pred_check
      _
    $region43: #{tpu_custom_call.1} parent=1 // pred_check_branch
      %608 = sbr.rel (0) target = $region45
    $region44: #{tpu_custom_call.1} parent=1 // pred_region
      %s610 = ssub.s32 64, 64
      %611 = vsyncadd [#allocation6], %s610
      %s613 = sshll.u32 [#allocation9], 4
      %s614 = int_to_ptr.vmem [resolvable:$true] %s613
      %616 = dma.vmem_to_hbm [thread:$0]  %s614, 64, %s8, [#allocation6]
    $region45: #{tpu_custom_call.1} parent=1 // pred_fallthru
      _
    // Predicated region
    $region46: #{tpu_custom_call.1} parent=1 // pred_check
      _
    $region47: #{tpu_custom_call.1} parent=1 // pred_check_branch
      %618 = sbr.rel (0) target = $region49
    $region48: #{tpu_custom_call.1} parent=1 // pred_region
      %619 = dma.done [#allocation6], 64
    $region49: #{tpu_custom_call.1} parent=1 // pred_fallthru
      _
    %620 = vsyncpa [#allocation5], 1
    %621 = vsyncpa [#allocation8], 1
    %622 = vsyncpa [#allocation6], 1

</llo_original>
